<compile_context>
chip_gen: v6e
topology: v6e:2x2x1
jax: 0.10.0
libtpu: 0.0.40
codegen_flags: <defaults>
</compile_context>

<pallas_src>
import jax
import jax.numpy as jnp
from jax import lax
from jax.experimental import pallas as pl
from jax.experimental.pallas import tpu as pltpu

BN_EPS = 1e-3  # matches nn.BatchNorm1d(eps=0.001)


def _generator_kernel(x_ref, w_ref, p_ref, o_ref):
    """x_ref: (B,128) f32; w_ref: (2,128,128) f32 (pre-transposed (in,out));
    p_ref: (4,128) f32 rows = [gamma1, beta1, gamma2, beta2]; o_ref: (B,128)."""
    x = x_ref[...]

    g1 = p_ref[0:1, :]
    beta1 = p_ref[1:2, :]
    g2 = p_ref[2:3, :]
    beta2 = p_ref[3:4, :]

    # ---- gen_block1: Linear -> BatchNorm1d(batch stats) -> ReLU, + residual ----
    # Linear bias omitted: exactly cancelled by the BN mean subtraction.
    h1 = jnp.dot(x, w_ref[0], preferred_element_type=jnp.float32)
    mu1 = jnp.mean(h1, axis=0, keepdims=True)            # (1,128) sublane reduce
    d1 = h1 - mu1
    var1 = jnp.mean(d1 * d1, axis=0, keepdims=True)      # biased variance (train mode)
    scale1 = lax.rsqrt(var1 + BN_EPS) * g1                # fold gamma on the (1,128) row
    out1 = x + jnp.maximum(d1 * scale1 + beta1, 0.0)

    # ---- gen_block2: Linear -> BatchNorm1d(batch stats) -> Tanh, + residual ----
    h2 = jnp.dot(out1, w_ref[1], preferred_element_type=jnp.float32)
    mu2 = jnp.mean(h2, axis=0, keepdims=True)
    d2 = h2 - mu2
    var2 = jnp.mean(d2 * d2, axis=0, keepdims=True)
    scale2 = lax.rsqrt(var2 + BN_EPS) * g2
    o_ref[...] = (out1 + jnp.tanh(d2 * scale2 + beta2)).astype(o_ref.dtype)


def pack_generator_params(params):
    """Pack raw (PyTorch-layout-equivalent) params for the kernel.

    Returns (w_packed, p_packed):
      w_packed: (2, 128, 128) f32, weights stored (in, out) so kernel does x @ W.
      p_packed: (4, 128) f32 rows [gamma1, beta1, gamma2, beta2].
    Linear biases are dropped (cancelled by train-mode BatchNorm)."""
    w1, _b1, g1, beta1, w2, _b2, g2, beta2 = params
    w_packed = jnp.stack([w1, w2], axis=0).astype(jnp.float32)
    p_packed = jnp.concatenate([g1, beta1, g2, beta2], axis=0).astype(jnp.float32)
    return w_packed, p_packed


def generator_forward(x, w_packed, p_packed):
    """x: [batch, 128] f32.  Single gridless fused kernel (training-mode BN
    needs whole-batch statistics; the whole problem is one VMEM block)."""
    batch = x.shape[0]
    gen_dim = w_packed.shape[2]
    vmem = pl.BlockSpec(memory_space=pltpu.MemorySpace.VMEM)
    return pl.pallas_call(
        _generator_kernel,
        out_shape=jax.ShapeDtypeStruct((batch, gen_dim), x.dtype),
        in_specs=[vmem, vmem, vmem],
        out_specs=vmem,
    )(x, w_packed, p_packed)


def init_generator_params(key, z_dim, hidden_size, gen_dim=128):
    """Deterministic synthetic parameters mirroring the PyTorch module.
    Linear weights are (in, out) (pre-transposed); biases / BN params are (1, out)."""
    assert z_dim == hidden_size == gen_dim, (
        "residual adds in the Generator require z_dim == hidden_size == genDim")
    k1, k2, k3, k4, k5, k6, k7, k8 = jax.random.split(key, 8)
    scale = 0.05
    w1 = scale * jax.random.normal(k1, (z_dim, hidden_size), jnp.float32)
    b1 = scale * jax.random.normal(k2, (1, hidden_size), jnp.float32)
    g1 = 1.0 + scale * jax.random.normal(k3, (1, hidden_size), jnp.float32)
    beta1 = scale * jax.random.normal(k4, (1, hidden_size), jnp.float32)
    w2 = scale * jax.random.normal(k5, (hidden_size, gen_dim), jnp.float32)
    b2 = scale * jax.random.normal(k6, (1, gen_dim), jnp.float32)
    g2 = 1.0 + scale * jax.random.normal(k7, (1, gen_dim), jnp.float32)
    beta2 = scale * jax.random.normal(k8, (1, gen_dim), jnp.float32)
    return (w1, b1, g1, beta1, w2, b2, g2, beta2)


def _reference_forward(x, params):
    """Pure-JAX reference mirroring the PyTorch forward (train-mode BatchNorm),
    *including* the Linear biases that the kernel drops."""
    w1, b1, g1, beta1, w2, b2, g2, beta2 = params

    def bn(h, g, beta):
        mu = jnp.mean(h, axis=0, keepdims=True)
        var = jnp.mean((h - mu) ** 2, axis=0, keepdims=True)
        return (h - mu) / jnp.sqrt(var + BN_EPS) * g + beta

    h1 = bn(x @ w1 + b1, g1, beta1)
    out1 = x + jax.nn.relu(h1)
    h2 = bn(out1 @ w2 + b2, g2, beta2)
    return out1 + jnp.tanh(h2)


if __name__ == "__main__":
    batch = 8          # multiple of 8: (B,128) f32 is an exact (sublane, lane) tile
    z_dim = 128        # residual structure requires z_dim == hidden_size == genDim
    hidden_size = 128
    gen_dim = 128

    key = jax.random.PRNGKey(0)
    kx, kp = jax.random.split(key, 2)
    x = jax.random.normal(kx, (batch, z_dim), jnp.float32)
    params = init_generator_params(kp, z_dim, hidden_size, gen_dim)
    w_packed, p_packed = pack_generator_params(params)

    out = generator_forward(x, w_packed, p_packed)
    out = jax.block_until_ready(out)
    ref = _reference_forward(x, params)

    assert out.shape == (batch, gen_dim)
    assert jnp.allclose(out, ref, atol=1e-3, rtol=1e-3), (
        float(jnp.max(jnp.abs(out - ref))))

    # TODO(synk): BatchNorm1d running_mean / running_var updates are a training
    # side effect and are not produced by this forward kernel.
    print("KERNEL_OK")
</pallas_src>

<mosaic_0001>
module attributes {stable_mosaic.version = 11 : i64} {
  func.func @_generator_kernel(%arg0: memref<8x128xf32, #tpu.memory_space<vmem>>, %arg1: memref<2x128x128xf32, #tpu.memory_space<vmem>>, %arg2: memref<4x128xf32, #tpu.memory_space<vmem>>, %arg3: memref<8x128xf32, #tpu.memory_space<vmem>>) attributes {dimension_semantics = [], scalar_prefetch = 0 : i64, scratch_operands = 0 : i64, tpu.core_type = #tpu.core_type<tc>} {
    %c0 = arith.constant 0 : index
    %c0_0 = arith.constant 0 : index
    %0 = vector.load %arg0[%c0, %c0_0] : memref<8x128xf32, #tpu.memory_space<vmem>>, vector<8x128xf32>
    %c0_1 = arith.constant 0 : index
    %c0_2 = arith.constant 0 : index
    %1 = vector.load %arg2[%c0_1, %c0_2] : memref<4x128xf32, #tpu.memory_space<vmem>>, vector<1x128xf32>
    %c1 = arith.constant 1 : index
    %c0_3 = arith.constant 0 : index
    %2 = vector.load %arg2[%c1, %c0_3] : memref<4x128xf32, #tpu.memory_space<vmem>>, vector<1x128xf32>
    %c2 = arith.constant 2 : index
    %c0_4 = arith.constant 0 : index
    %3 = vector.load %arg2[%c2, %c0_4] : memref<4x128xf32, #tpu.memory_space<vmem>>, vector<1x128xf32>
    %c3 = arith.constant 3 : index
    %c0_5 = arith.constant 0 : index
    %4 = vector.load %arg2[%c3, %c0_5] : memref<4x128xf32, #tpu.memory_space<vmem>>, vector<1x128xf32>
    %c0_6 = arith.constant 0 : index
    %c0_7 = arith.constant 0 : index
    %c0_8 = arith.constant 0 : index
    %5 = vector.load %arg1[%c0_6, %c0_7, %c0_8] : memref<2x128x128xf32, #tpu.memory_space<vmem>>, vector<1x128x128xf32>
    %6 = vector.shape_cast %5 : vector<1x128x128xf32> to vector<128x128xf32>
    %cst = arith.constant dense<0.000000e+00> : vector<8x128xf32>
    %7 = tpu.matmul %0, %6, %cst {dimension_numbers = #tpu.dot_dimension_numbers<[1], [0], [0], [1], [0, 0, 1, 1], [], []>} : vector<8x128xf32>, vector<128x128xf32>, vector<8x128xf32> -> vector<8x128xf32>
    %cst_9 = arith.constant dense<0.000000e+00> : vector<128xf32>
    %8 = vector.multi_reduction <add>, %7, %cst_9 [0] : vector<8x128xf32> to vector<128xf32>
    %9 = vector.shape_cast %8 : vector<128xf32> to vector<1x128xf32>
    %cst_10 = arith.constant 8.000000e+00 : f32
    %10 = vector.broadcast %cst_10 : f32 to vector<1x128xf32>
    %11 = arith.divf %9, %10 : vector<1x128xf32>
    %12 = vector.broadcast %11 : vector<1x128xf32> to vector<8x128xf32>
    %13 = arith.subf %7, %12 : vector<8x128xf32>
    %14 = arith.mulf %13, %13 : vector<8x128xf32>
    %cst_11 = arith.constant dense<0.000000e+00> : vector<128xf32>
    %15 = vector.multi_reduction <add>, %14, %cst_11 [0] : vector<8x128xf32> to vector<128xf32>
    %16 = vector.shape_cast %15 : vector<128xf32> to vector<1x128xf32>
    %cst_12 = arith.constant 8.000000e+00 : f32
    %17 = vector.broadcast %cst_12 : f32 to vector<1x128xf32>
    %18 = arith.divf %16, %17 : vector<1x128xf32>
    %cst_13 = arith.constant 1.000000e-03 : f32
    %19 = vector.broadcast %cst_13 : f32 to vector<1x128xf32>
    %20 = arith.addf %18, %19 : vector<1x128xf32>
    %21 = math.rsqrt %20 : vector<1x128xf32>
    %22 = arith.mulf %21, %1 : vector<1x128xf32>
    %23 = vector.broadcast %22 : vector<1x128xf32> to vector<8x128xf32>
    %24 = arith.mulf %13, %23 : vector<8x128xf32>
    %25 = vector.broadcast %2 : vector<1x128xf32> to vector<8x128xf32>
    %26 = arith.addf %24, %25 : vector<8x128xf32>
    %cst_14 = arith.constant 0.000000e+00 : f32
    %27 = vector.broadcast %cst_14 : f32 to vector<8x128xf32>
    %28 = arith.maximumf %26, %27 : vector<8x128xf32>
    %29 = arith.addf %0, %28 : vector<8x128xf32>
    %c1_15 = arith.constant 1 : index
    %c0_16 = arith.constant 0 : index
    %c0_17 = arith.constant 0 : index
    %30 = vector.load %arg1[%c1_15, %c0_16, %c0_17] : memref<2x128x128xf32, #tpu.memory_space<vmem>>, vector<1x128x128xf32>
    %31 = vector.shape_cast %30 : vector<1x128x128xf32> to vector<128x128xf32>
    %cst_18 = arith.constant dense<0.000000e+00> : vector<8x128xf32>
    %32 = tpu.matmul %29, %31, %cst_18 {dimension_numbers = #tpu.dot_dimension_numbers<[1], [0], [0], [1], [0, 0, 1, 1], [], []>} : vector<8x128xf32>, vector<128x128xf32>, vector<8x128xf32> -> vector<8x128xf32>
    %cst_19 = arith.constant dense<0.000000e+00> : vector<128xf32>
    %33 = vector.multi_reduction <add>, %32, %cst_19 [0] : vector<8x128xf32> to vector<128xf32>
    %34 = vector.shape_cast %33 : vector<128xf32> to vector<1x128xf32>
    %cst_20 = arith.constant 8.000000e+00 : f32
    %35 = vector.broadcast %cst_20 : f32 to vector<1x128xf32>
    %36 = arith.divf %34, %35 : vector<1x128xf32>
    %37 = vector.broadcast %36 : vector<1x128xf32> to vector<8x128xf32>
    %38 = arith.subf %32, %37 : vector<8x128xf32>
    %39 = arith.mulf %38, %38 : vector<8x128xf32>
    %cst_21 = arith.constant dense<0.000000e+00> : vector<128xf32>
    %40 = vector.multi_reduction <add>, %39, %cst_21 [0] : vector<8x128xf32> to vector<128xf32>
    %41 = vector.shape_cast %40 : vector<128xf32> to vector<1x128xf32>
    %cst_22 = arith.constant 8.000000e+00 : f32
    %42 = vector.broadcast %cst_22 : f32 to vector<1x128xf32>
    %43 = arith.divf %41, %42 : vector<1x128xf32>
    %cst_23 = arith.constant 1.000000e-03 : f32
    %44 = vector.broadcast %cst_23 : f32 to vector<1x128xf32>
    %45 = arith.addf %43, %44 : vector<1x128xf32>
    %46 = math.rsqrt %45 : vector<1x128xf32>
    %47 = arith.mulf %46, %3 : vector<1x128xf32>
    %48 = vector.broadcast %47 : vector<1x128xf32> to vector<8x128xf32>
    %49 = arith.mulf %38, %48 : vector<8x128xf32>
    %50 = vector.broadcast %4 : vector<1x128xf32> to vector<8x128xf32>
    %51 = arith.addf %49, %50 : vector<8x128xf32>
    %52 = math.tanh %51 : vector<8x128xf32>
    %53 = arith.addf %29, %52 : vector<8x128xf32>
    %c0_24 = arith.constant 0 : index
    %c0_25 = arith.constant 0 : index
    %54 = vector.load %arg3[%c0_24, %c0_25] : memref<8x128xf32, #tpu.memory_space<vmem>>, vector<8x128xf32>
    tpu.vector_store %arg3[%c0_24, %c0_25], %53 {strides = array<i32>} : memref<8x128xf32, #tpu.memory_space<vmem>>, vector<8x128xf32>,
    return
  }
}

</mosaic_0001>

<llo_original>
// kernel: tpu_custom_call.1
$region0: #{tpu_custom_call.1}
  #allocation0 [shape = 'u32[]', space=smem, size = 0x4, offset = 0x4, fixed_abs, tag = 'smem constant byte address 0x4 - core index']
  #allocation1 [shape = 'u32[144,128]{1,0:T(1,128)}', space=vmem, size = 0x12000, scoped, tag = 'internal scratch']
  %s0 = inlined_call_operand.hbm [shape: f32[8,128], index: 0, kind: input, shape index: {}]
  %s1 = inlined_call_operand.hbm [shape: f32[2,128,128], index: 1, kind: input, shape index: {}]
  %s2 = inlined_call_operand.hbm [shape: f32[4,128], index: 2, kind: input, shape index: {}]
  %s3 = inlined_call_operand.hbm [shape: f32[8,128], index: 3, kind: output, shape index: {}]
  %s4 = sld [smem:[#allocation0]]
  $region34: #{tpu_custom_call.1} parent=0
    _
  %s6 = ssub.s32 1, %s4
  %s7 = scalar_select 0, %s6, %s4
  $region1: #{tpu_custom_call.1} parent=0
    #allocation2 [shape = 'u8[4096]{0}', space=vmem, size = 0x1000, scoped, tag = 'input window, operand 0, single buffered']
    #allocation3 [shape = 's32[1]{0}', space=sflag, size = 0x4, scoped, tag = 'scoped memory for tpu_custom_call.1']
    #allocation4 [shape = 's32[1]{0}', space=sflag, size = 0x4, scoped, tag = 'scoped memory for tpu_custom_call.1']
    #allocation5 [shape = 'u8[131072]{0}', space=vmem, size = 0x20000, scoped, tag = 'input window, operand 1, single buffered']
    #allocation6 [shape = 's32[1]{0}', space=sflag, size = 0x4, scoped, tag = 'scoped memory for tpu_custom_call.1']
    #allocation7 [shape = 'u8[2048]{0}', space=vmem, size = 0x800, scoped, tag = 'input window, operand 2, single buffered']
    #allocation8 [shape = 'u8[4096]{0}', space=vmem, size = 0x1000, scoped, tag = 'output window, operand 0, single buffered']
    %8 = vsyncpa [#allocation3], 0
    %9 = vsyncpa [#allocation6], 0
    %10 = vsyncpa [#allocation4], 0
    // Predicated region
    $region2: #{tpu_custom_call.1} parent=1 // pred_check
      _
    $region3: #{tpu_custom_call.1} parent=1 // pred_check_branch
      %12 = sbr.rel (0) target = $region5
    $region4: #{tpu_custom_call.1} parent=1 // pred_region
      %s14 = ssub.s32 128, 128
      %15 = vsyncadd [#allocation3], %s14
      %s17 = sshll.u32 [#allocation2], 4
      %s18 = int_to_ptr.vmem [resolvable:$true] %s17
      %20 = dma.hbm_to_vmem [thread:$0]  %s0, 128, %s18, [#allocation3]
    $region5: #{tpu_custom_call.1} parent=1 // pred_fallthru
      _
    // Predicated region
    $region6: #{tpu_custom_call.1} parent=1 // pred_check
      _
    $region7: #{tpu_custom_call.1} parent=1 // pred_check_branch
      %22 = sbr.rel (0) target = $region9
    $region8: #{tpu_custom_call.1} parent=1 // pred_region
      %s24 = ssub.s32 4096, 4096
      %25 = vsyncadd [#allocation6], %s24
      %s26 = sshll.u32 [#allocation5], 4
      %s27 = int_to_ptr.vmem [resolvable:$true] %s26
      %32 = dma.hbm_to_vmem [thread:$0]  %s1, 4096, %s27, [#allocation6], 128, 128, 8
    $region9: #{tpu_custom_call.1} parent=1 // pred_fallthru
      _
    // Predicated region
    $region10: #{tpu_custom_call.1} parent=1 // pred_check
      _
    $region11: #{tpu_custom_call.1} parent=1 // pred_check_branch
      %34 = sbr.rel (0) target = $region13
    $region12: #{tpu_custom_call.1} parent=1 // pred_region
      %s36 = ssub.s32 64, 64
      %37 = vsyncadd [#allocation6], %s36
      %s39 = sshll.u32 [#allocation7], 4
      %s40 = int_to_ptr.vmem [resolvable:$true] %s39
      %42 = dma.hbm_to_vmem [thread:$0]  %s2, 64, %s40, [#allocation6]
    $region13: #{tpu_custom_call.1} parent=1 // pred_fallthru
      _
    // Predicated region
    $region14: #{tpu_custom_call.1} parent=1 // pred_check
      _
    $region15: #{tpu_custom_call.1} parent=1 // pred_check_branch
      %44 = sbr.rel (0) target = $region17
    $region16: #{tpu_custom_call.1} parent=1 // pred_region
      %45 = dma.done [#allocation3], 128
    $region17: #{tpu_custom_call.1} parent=1 // pred_fallthru
      _
    // Predicated region
    $region18: #{tpu_custom_call.1} parent=1 // pred_check
      _
    $region19: #{tpu_custom_call.1} parent=1 // pred_check_branch
      %47 = sbr.rel (0) target = $region21
    $region20: #{tpu_custom_call.1} parent=1 // pred_region
      %48 = dma.done [#allocation6], 4096
    $region21: #{tpu_custom_call.1} parent=1 // pred_fallthru
      _
    // Predicated region
    $region22: #{tpu_custom_call.1} parent=1 // pred_check
      _
    $region23: #{tpu_custom_call.1} parent=1 // pred_check_branch
      %50 = sbr.rel (0) target = $region25
    $region24: #{tpu_custom_call.1} parent=1 // pred_region
      %51 = dma.done [#allocation6], 64
    $region25: #{tpu_custom_call.1} parent=1 // pred_fallthru
      _
    %v52 = vld [vmem:[#allocation2] sm:$0xff]
    %v53 = vld [vmem:[#allocation7] sm:$0x1]
    %v54 = vld [vmem:[#allocation7 + $0x1] sm:$0x1]
    %v55 = vld [vmem:[#allocation7 + $0x2] sm:$0x1]
    %v56 = vld [vmem:[#allocation7 + $0x3] sm:$0x1]
    %v57 = vld [vmem:[#allocation5] sm:$0xff]
    %v58 = vld [vmem:[#allocation5 + $0x8] sm:$0xff]
    %v59 = vld [vmem:[#allocation5 + $0x10] sm:$0xff]
    %v60 = vld [vmem:[#allocation5 + $0x18] sm:$0xff]
    %v61 = vld [vmem:[#allocation5 + $0x20] sm:$0xff]
    %v62 = vld [vmem:[#allocation5 + $0x28] sm:$0xff]
    %v63 = vld [vmem:[#allocation5 + $0x30] sm:$0xff]
    %v64 = vld [vmem:[#allocation5 + $0x38] sm:$0xff]
    %v65 = vld [vmem:[#allocation5 + $0x40] sm:$0xff]
    %v66 = vld [vmem:[#allocation5 + $0x48] sm:$0xff]
    %v67 = vld [vmem:[#allocation5 + $0x50] sm:$0xff]
    %v68 = vld [vmem:[#allocation5 + $0x58] sm:$0xff]
    %v69 = vld [vmem:[#allocation5 + $0x60] sm:$0xff]
    %v70 = vld [vmem:[#allocation5 + $0x68] sm:$0xff]
    %v71 = vld [vmem:[#allocation5 + $0x70] sm:$0xff]
    %v72 = vld [vmem:[#allocation5 + $0x78] sm:$0xff]
    %73 = vmatprep.subr.mxu0 0.0
    %74 = vmatpush1.msra.mxu0 %v72
    %75 = vmatprep.subr.mxu0 0.0
    %76 = vmatpush1.msra.mxu0 %v71
    %77 = vmatprep.subr.mxu0 0.0
    %78 = vmatpush1.msra.mxu0 %v70
    %79 = vmatprep.subr.mxu0 0.0
    %80 = vmatpush1.msra.mxu0 %v69
    %81 = vmatprep.subr.mxu0 0.0
    %82 = vmatpush1.msra.mxu0 %v68
    %83 = vmatprep.subr.mxu0 0.0
    %84 = vmatpush1.msra.mxu0 %v67
    %85 = vmatprep.subr.mxu0 0.0
    %86 = vmatpush1.msra.mxu0 %v66
    %87 = vmatprep.subr.mxu0 0.0
    %88 = vmatpush1.msra.mxu0 %v65
    %89 = vmatprep.subr.mxu0 0.0
    %90 = vmatpush1.msra.mxu0 %v64
    %91 = vmatprep.subr.mxu0 0.0
    %92 = vmatpush1.msra.mxu0 %v63
    %93 = vmatprep.subr.mxu0 0.0
    %94 = vmatpush1.msra.mxu0 %v62
    %95 = vmatprep.subr.mxu0 0.0
    %96 = vmatpush1.msra.mxu0 %v61
    %97 = vmatprep.subr.mxu0 0.0
    %98 = vmatpush1.msra.mxu0 %v60
    %99 = vmatprep.subr.mxu0 0.0
    %100 = vmatpush1.msra.mxu0 %v59
    %101 = vmatprep.subr.mxu0 0.0
    %102 = vmatpush1.msra.mxu0 %v58
    %103 = vmatprep.subr.mxu0 0.0
    %104 = vmatpush1.msra.mxu0 %v57
    %105 = vmatprep.subr.mxu0 0.0
    %106 = vmatpush2.msra.mxu0 0.0
    %107 = vmatprep.subr.mxu0 0.0
    %108 = vmatpush2.msra.mxu0 0.0
    %109 = vmatprep.subr.mxu0 0.0
    %110 = vmatpush2.msra.mxu0 0.0
    %111 = vmatprep.subr.mxu0 0.0
    %112 = vmatpush2.msra.mxu0 0.0
    %113 = vmatprep.subr.mxu0 0.0
    %114 = vmatpush2.msra.mxu0 0.0
    %115 = vmatprep.subr.mxu0 0.0
    %116 = vmatpush2.msra.mxu0 0.0
    %117 = vmatprep.subr.mxu0 0.0
    %118 = vmatpush2.msra.mxu0 0.0
    %119 = vmatprep.subr.mxu0 0.0
    %120 = vmatpush2.msra.mxu0 0.0
    %121 = vmatprep.subr.mxu0 0.0
    %122 = vmatpush2.msra.mxu0 0.0
    %123 = vmatprep.subr.mxu0 0.0
    %124 = vmatpush2.msra.mxu0 0.0
    %125 = vmatprep.subr.mxu0 0.0
    %126 = vmatpush2.msra.mxu0 0.0
    %127 = vmatprep.subr.mxu0 0.0
    %128 = vmatpush2.msra.mxu0 0.0
    %129 = vmatprep.subr.mxu0 0.0
    %130 = vmatpush2.msra.mxu0 0.0
    %131 = vmatprep.subr.mxu0 0.0
    %132 = vmatpush2.msra.mxu0 0.0
    %133 = vmatprep.subr.mxu0 0.0
    %134 = vmatpush2.msra.mxu0 0.0
    %135 = vmatprep.subr.mxu0 0.0
    %136 = vmatpush2.msra.mxu0 0.0
    %137 = vmatprep.mubr.f32.mxu0 0.0
    %138 = vmatmul.mubr.f32.gmra.mxu0 %v52
    %v139 = vpop.f32.mrf.mxu0
    %v140 = vadd.f32 0.0, %v139
    %v141 = vpop.f32.mrf.mxu0
    %142 = vdwg.mxu0
    %v143 = vrot.slane %v140, 4
    %v144 = vadd.f32 %v140, %v143
    %v145 = vrot.slane %v144, 2
    %v146 = vadd.f32 %v144, %v145
    %v147 = vrot.slane %v146, 1
    %v148 = vadd.f32 %v146, %v147
    %v149 = vrcp.pop 8.0
    %v150 = vmul.f32 %v148, %v149
    %v151 = vsub.f32 %v140, %v150
    %v152 = vmul.f32 %v151, %v151
    %v153 = vrot.slane %v152, 4
    %v154 = vadd.f32 %v152, %v153
    %v155 = vrot.slane %v154, 2
    %v156 = vadd.f32 %v154, %v155
    %v157 = vrot.slane %v156, 1
    %v158 = vadd.f32 %v156, %v157
    %v159 = vmul.f32 %v158, %v149
    %v160 = vadd.f32 %v159, 0.001
    %v161 = vrsqrt.pop %v160
    %v162 = vmul.f32 %v161, %v53
    %v163 = vlaneseq
    %v164 = vshrl.u32 %v163, 7
    %v165 = vsub.s32 0, %v164
    %v166 = vrot.slane %v162, %v165
    %v167 = vmul.f32 %v151, %v166
    %v168 = vlaneseq
    %v169 = vshrl.u32 %v168, 7
    %v170 = vsub.s32 0, %v169
    %v171 = vrot.slane %v54, %v170
    %v172 = vadd.f32 %v167, %v171
    %v173 = vmax.f32 %v172, 0.0
    %v174 = vadd.f32 %v52, %v173
    %s175 = scalar_lea.vmem [#allocation5], 128
    %v176 = vld [vmem:[%s175] sm:$0xff]
    %v177 = vld [vmem:[%s175 + $0x8] sm:$0xff]
    %v178 = vld [vmem:[%s175 + $0x10] sm:$0xff]
    %v179 = vld [vmem:[%s175 + $0x18] sm:$0xff]
    %v180 = vld [vmem:[%s175 + $0x20] sm:$0xff]
    %v181 = vld [vmem:[%s175 + $0x28] sm:$0xff]
    %v182 = vld [vmem:[%s175 + $0x30] sm:$0xff]
    %v183 = vld [vmem:[%s175 + $0x38] sm:$0xff]
    %v184 = vld [vmem:[%s175 + $0x40] sm:$0xff]
    %v185 = vld [vmem:[%s175 + $0x48] sm:$0xff]
    %v186 = vld [vmem:[%s175 + $0x50] sm:$0xff]
    %v187 = vld [vmem:[%s175 + $0x58] sm:$0xff]
    %v188 = vld [vmem:[%s175 + $0x60] sm:$0xff]
    %v189 = vld [vmem:[%s175 + $0x68] sm:$0xff]
    %v190 = vld [vmem:[%s175 + $0x70] sm:$0xff]
    %v191 = vld [vmem:[%s175 + $0x78] sm:$0xff]
    %192 = vmatprep.subr.mxu0 0.0
    %193 = vmatpush1.msra.mxu0 %v191
    %194 = vmatprep.subr.mxu0 0.0
    %195 = vmatpush1.msra.mxu0 %v190
    %196 = vmatprep.subr.mxu0 0.0
    %197 = vmatpush1.msra.mxu0 %v189
    %198 = vmatprep.subr.mxu0 0.0
    %199 = vmatpush1.msra.mxu0 %v188
    %200 = vmatprep.subr.mxu0 0.0
    %201 = vmatpush1.msra.mxu0 %v187
    %202 = vmatprep.subr.mxu0 0.0
    %203 = vmatpush1.msra.mxu0 %v186
    %204 = vmatprep.subr.mxu0 0.0
    %205 = vmatpush1.msra.mxu0 %v185
    %206 = vmatprep.subr.mxu0 0.0
    %207 = vmatpush1.msra.mxu0 %v184
    %208 = vmatprep.subr.mxu0 0.0
    %209 = vmatpush1.msra.mxu0 %v183
    %210 = vmatprep.subr.mxu0 0.0
    %211 = vmatpush1.msra.mxu0 %v182
    %212 = vmatprep.subr.mxu0 0.0
    %213 = vmatpush1.msra.mxu0 %v181
    %214 = vmatprep.subr.mxu0 0.0
    %215 = vmatpush1.msra.mxu0 %v180
    %216 = vmatprep.subr.mxu0 0.0
    %217 = vmatpush1.msra.mxu0 %v179
    %218 = vmatprep.subr.mxu0 0.0
    %219 = vmatpush1.msra.mxu0 %v178
    %220 = vmatprep.subr.mxu0 0.0
    %221 = vmatpush1.msra.mxu0 %v177
    %222 = vmatprep.subr.mxu0 0.0
    %223 = vmatpush1.msra.mxu0 %v176
    %224 = vmatprep.subr.mxu0 0.0
    %225 = vmatpush2.msra.mxu0 0.0
    %226 = vmatprep.subr.mxu0 0.0
    %227 = vmatpush2.msra.mxu0 0.0
    %228 = vmatprep.subr.mxu0 0.0
    %229 = vmatpush2.msra.mxu0 0.0
    %230 = vmatprep.subr.mxu0 0.0
    %231 = vmatpush2.msra.mxu0 0.0
    %232 = vmatprep.subr.mxu0 0.0
    %233 = vmatpush2.msra.mxu0 0.0
    %234 = vmatprep.subr.mxu0 0.0
    %235 = vmatpush2.msra.mxu0 0.0
    %236 = vmatprep.subr.mxu0 0.0
    %237 = vmatpush2.msra.mxu0 0.0
    %238 = vmatprep.subr.mxu0 0.0
    %239 = vmatpush2.msra.mxu0 0.0
    %240 = vmatprep.subr.mxu0 0.0
    %241 = vmatpush2.msra.mxu0 0.0
    %242 = vmatprep.subr.mxu0 0.0
    %243 = vmatpush2.msra.mxu0 0.0
    %244 = vmatprep.subr.mxu0 0.0
    %245 = vmatpush2.msra.mxu0 0.0
    %246 = vmatprep.subr.mxu0 0.0
    %247 = vmatpush2.msra.mxu0 0.0
    %248 = vmatprep.subr.mxu0 0.0
    %249 = vmatpush2.msra.mxu0 0.0
    %250 = vmatprep.subr.mxu0 0.0
    %251 = vmatpush2.msra.mxu0 0.0
    %252 = vmatprep.subr.mxu0 0.0
    %253 = vmatpush2.msra.mxu0 0.0
    %254 = vmatprep.subr.mxu0 0.0
    %255 = vmatpush2.msra.mxu0 0.0
    %256 = vmatprep.mubr.f32.mxu0 0.0
    %257 = vmatmul.mubr.f32.gmra.mxu0 %v174
    %v258 = vpop.f32.mrf.mxu0
    %v259 = vadd.f32 0.0, %v258
    %v260 = vpop.f32.mrf.mxu0
    %261 = vdwg.mxu0
    %v262 = vrot.slane %v259, 4
    %v263 = vadd.f32 %v259, %v262
    %v264 = vrot.slane %v263, 2
    %v265 = vadd.f32 %v263, %v264
    %v266 = vrot.slane %v265, 1
    %v267 = vadd.f32 %v265, %v266
    %v268 = vmul.f32 %v267, %v149
    %v269 = vsub.f32 %v259, %v268
    %v270 = vmul.f32 %v269, %v269
    %v271 = vrot.slane %v270, 4
    %v272 = vadd.f32 %v270, %v271
    %v273 = vrot.slane %v272, 2
    %v274 = vadd.f32 %v272, %v273
    %v275 = vrot.slane %v274, 1
    %v276 = vadd.f32 %v274, %v275
    %v277 = vmul.f32 %v276, %v149
    %v278 = vadd.f32 %v277, 0.001
    %v279 = vrsqrt.pop %v278
    %v280 = vmul.f32 %v279, %v55
    %v281 = vlaneseq
    %v282 = vshrl.u32 %v281, 7
    %v283 = vsub.s32 0, %v282
    %v284 = vrot.slane %v280, %v283
    %v285 = vmul.f32 %v269, %v284
    %v286 = vlaneseq
    %v287 = vshrl.u32 %v286, 7
    %v288 = vsub.s32 0, %v287
    %v289 = vrot.slane %v56, %v288
    %v290 = vadd.f32 %v285, %v289
    %v291 = vtanh.pop %v290
    %v292 = vadd.f32 %v174, %v291
    %293 = vst [vmem:[#allocation8] sm:$0xff] %v292
    // Predicated region
    $region26: #{tpu_custom_call.1} parent=1 // pred_check
      _
    $region27: #{tpu_custom_call.1} parent=1 // pred_check_branch
      %295 = sbr.rel (0) target = $region29
    $region28: #{tpu_custom_call.1} parent=1 // pred_region
      %s297 = ssub.s32 128, 128
      %298 = vsyncadd [#allocation4], %s297
      %s300 = sshll.u32 [#allocation8], 4
      %s301 = int_to_ptr.vmem [resolvable:$true] %s300
      %303 = dma.vmem_to_hbm [thread:$0]  %s301, 128, %s3, [#allocation4]
    $region29: #{tpu_custom_call.1} parent=1 // pred_fallthru
      _
    // Predicated region
    $region30: #{tpu_custom_call.1} parent=1 // pred_check
      _
    $region31: #{tpu_custom_call.1} parent=1 // pred_check_branch
      %305 = sbr.rel (0) target = $region33
    $region32: #{tpu_custom_call.1} parent=1 // pred_region
      %306 = dma.done [#allocation4], 128
    $region33: #{tpu_custom_call.1} parent=1 // pred_fallthru
      _
    %307 = vsyncpa [#allocation3], 1
    %308 = vsyncpa [#allocation6], 1
    %309 = vsyncpa [#allocation4], 1

</llo_original>
